<compile_context>
chip_gen: v5e
topology: v5e:2x2
jax: 0.10.0
libtpu: 0.0.40
codegen_flags: <defaults>
</compile_context>

<pallas_src>
import jax
import jax.numpy as jnp
from jax.experimental import pallas as pl
from jax.experimental.pallas import tpu as pltpu


def _round_up(n: int, m: int) -> int:
    return ((n + m - 1) // m) * m


def speech_encoder_kernel(x_ref, w1_ref, b1_ref, w2_ref, b2_ref, o_ref):
    # fc1: accumulator initialized from the broadcast f32 bias, ReLU in f32.
    h = b1_ref[...] + jnp.dot(
        x_ref[...], w1_ref[...], preferred_element_type=jnp.float32
    )
    h = jnp.maximum(h, 0.0)
    # fc2: cast h to the weight dtype for the MXU; f32 accumulation + f32 bias.
    o = b2_ref[...] + jnp.dot(
        h.astype(w2_ref.dtype), w2_ref[...], preferred_element_type=jnp.float32
    )
    o_ref[...] = o.astype(o_ref.dtype)


def prepare_params(w1, b1, w2, b2, *, use_bf16=True):
    """One-time parameter prep, hoisted out of the per-call path.

    Weights are (in_features, out_features) i.e. transposed vs nn.Linear.
    Weights optionally cast to bf16 (default); biases kept f32 and reshaped to
    (1, dim) for a 2-D VMEM layout.
    """
    wdt = jnp.bfloat16 if use_bf16 else jnp.float32
    return (
        w1.astype(wdt),
        b1.astype(jnp.float32).reshape(1, -1),
        w2.astype(wdt),
        b2.astype(jnp.float32).reshape(1, -1),
    )


def _pick_batch_tile(B: int, batch_tile: int) -> int:
    """Batch tile: multiple of 8 (or == B), and >=2 grid steps when B allows
    so v7x's two TensorCores both get work under dimension_semantics=parallel."""
    if B <= 8:
        return B  # single tile equal to the full dim is always legal
    if B <= batch_tile:
        return min(_round_up(pl.cdiv(B, 2), 8), _round_up(B, 8))
    return batch_tile


def speech_encoder(x, w1, b1, w2, b2, *, batch_tile=1024, vmem_limit_bytes=None):
    """fc1 -> ReLU -> fc2 (raw logits; sigmoid/softmax are unused in forward).

    x: (B, S); w1: (S, H); b1: (1, H) or (H,); w2: (H, C); b2: (1, C) or (C,).
    Pass weights already cast (see prepare_params) so no per-call weight work.
    """
    B, S = x.shape
    H = w1.shape[1]
    C = w2.shape[1]

    # Per-call input cast only (no-op if x already matches the weight dtype).
    x = x.astype(w1.dtype)
    b1 = b1.reshape(1, H).astype(jnp.float32)
    b2 = b2.reshape(1, C).astype(jnp.float32)

    TB = _pick_batch_tile(B, batch_tile)
    nb = pl.cdiv(B, TB)

    def const_spec(shape):
        # Full-array block, same block every grid step -> stays VMEM-resident.
        return pl.BlockSpec(shape, lambda i: (0, 0))

    cp_kwargs = dict(dimension_semantics=("parallel",))
    if vmem_limit_bytes is not None:
        cp_kwargs["vmem_limit_bytes"] = vmem_limit_bytes

    return pl.pallas_call(
        speech_encoder_kernel,
        out_shape=jax.ShapeDtypeStruct((B, C), jnp.float32),
        grid=(nb,),
        in_specs=[
            pl.BlockSpec((TB, S), lambda i: (i, 0)),  # x: streamed over batch
            const_spec((S, H)),                       # w1 (resident)
            const_spec((1, H)),                       # b1 (resident)
            const_spec((H, C)),                       # w2 (resident)
            const_spec((1, C)),                       # b2 (resident)
        ],
        out_specs=pl.BlockSpec((TB, C), lambda i: (i, 0)),
        compiler_params=pltpu.CompilerParams(**cp_kwargs),
    )(x, w1, b1, w2, b2)


def init_params(key, seq_len, hidden_size, num_classes):
    """Deterministic init mimicking nn.Linear's U(-1/sqrt(fan_in), +1/sqrt(fan_in)).

    Weights returned already transposed to (in_features, out_features), f32.
    """
    k1, k2, k3, k4 = jax.random.split(key, 4)
    bound1 = 1.0 / jnp.sqrt(jnp.float32(seq_len))
    bound2 = 1.0 / jnp.sqrt(jnp.float32(hidden_size))
    w1 = jax.random.uniform(k1, (seq_len, hidden_size), jnp.float32, -bound1, bound1)
    b1 = jax.random.uniform(k2, (hidden_size,), jnp.float32, -bound1, bound1)
    w2 = jax.random.uniform(k3, (hidden_size, num_classes), jnp.float32, -bound2, bound2)
    b2 = jax.random.uniform(k4, (num_classes,), jnp.float32, -bound2, bound2)
    return w1, b1, w2, b2


if __name__ == "__main__":
    # Small shapes consistent with the module: seq_len=20, hidden_size=128,
    # num_classes=2, batch=8.
    batch_size, seq_len, hidden_size, num_classes = 8, 20, 128, 2

    key = jax.random.PRNGKey(0)
    kx, kp = jax.random.split(key)
    x = jax.random.normal(kx, (batch_size, seq_len), dtype=jnp.float32)
    w1, b1, w2, b2 = init_params(kp, seq_len, hidden_size, num_classes)

    # Pure-JAX f32 reference (raw logits; sigmoid/softmax unused in forward).
    ref = jnp.maximum(x @ w1 + b1, 0.0) @ w2 + b2

    # 1) f32 path: strict numerical check.
    p32 = prepare_params(w1, b1, w2, b2, use_bf16=False)
    out32 = jax.block_until_ready(speech_encoder(x, *p32))
    assert out32.shape == (batch_size, num_classes)
    assert jnp.allclose(out32, ref, atol=1e-5, rtol=1e-5)

    # 2) Default bf16 inputs/weights (f32 accumulation): compare against a
    #    matched-precision reference (same casts), tight tolerance.
    pbf = prepare_params(w1, b1, w2, b2, use_bf16=True)
    outbf = jax.block_until_ready(speech_encoder(x, *pbf))
    assert outbf.shape == (batch_size, num_classes)
    x_bf = x.astype(jnp.bfloat16)
    h_bf = jnp.maximum(
        jnp.dot(x_bf, w1.astype(jnp.bfloat16), preferred_element_type=jnp.float32)
        + b1,
        0.0,
    )
    ref_bf = (
        jnp.dot(h_bf.astype(jnp.bfloat16), w2.astype(jnp.bfloat16),
                preferred_element_type=jnp.float32)
        + b2
    )
    assert jnp.allclose(outbf, ref_bf, atol=1e-3, rtol=1e-3)
    # Loose sanity check against the f32 reference too.
    assert jnp.allclose(outbf, ref, atol=1e-1, rtol=1e-1)

    print("KERNEL_OK")
</pallas_src>

<mosaic_0001>
module attributes {stable_mosaic.version = 11 : i64} {
  func.func @speech_encoder_kernel(%arg0: i32, %arg1: memref<8x20xf32, #tpu.memory_space<vmem>>, %arg2: memref<20x128xf32, #tpu.memory_space<vmem>>, %arg3: memref<1x128xf32, #tpu.memory_space<vmem>>, %arg4: memref<128x2xf32, #tpu.memory_space<vmem>>, %arg5: memref<1x2xf32, #tpu.memory_space<vmem>>, %arg6: memref<8x2xf32, #tpu.memory_space<vmem>>) attributes {dimension_semantics = [#tpu.dimension_semantics<parallel>], iteration_bounds = array<i64: 1>, scalar_prefetch = 0 : i64, scratch_operands = 0 : i64, tpu.core_type = #tpu.core_type<tc>, window_params = [{transform_indices = @transform_0, window_bounds = array<i64: 8, 20>}, {pipeline_mode = #tpu.pipeline_mode<synchronous>, transform_indices = @transform_1, window_bounds = array<i64: 20, 128>}, {pipeline_mode = #tpu.pipeline_mode<synchronous>, transform_indices = @transform_2, window_bounds = array<i64: 1, 128>}, {pipeline_mode = #tpu.pipeline_mode<synchronous>, transform_indices = @transform_3, window_bounds = array<i64: 128, 2>}, {pipeline_mode = #tpu.pipeline_mode<synchronous>, transform_indices = @transform_4, window_bounds = array<i64: 1, 2>}, {transform_indices = @transform_5, window_bounds = array<i64: 8, 2>}]} {
    %c0 = arith.constant 0 : index
    %c0_0 = arith.constant 0 : index
    %0 = vector.load %arg3[%c0, %c0_0] : memref<1x128xf32, #tpu.memory_space<vmem>>, vector<1x128xf32>
    %c0_1 = arith.constant 0 : index
    %c0_2 = arith.constant 0 : index
    %1 = vector.load %arg1[%c0_1, %c0_2] : memref<8x20xf32, #tpu.memory_space<vmem>>, vector<8x20xf32>
    %c0_3 = arith.constant 0 : index
    %c0_4 = arith.constant 0 : index
    %2 = vector.load %arg2[%c0_3, %c0_4] : memref<20x128xf32, #tpu.memory_space<vmem>>, vector<20x128xf32>
    %cst = arith.constant dense<0.000000e+00> : vector<8x128xf32>
    %3 = tpu.matmul %1, %2, %cst {dimension_numbers = #tpu.dot_dimension_numbers<[1], [0], [0], [1], [0, 0, 1, 1], [], []>} : vector<8x20xf32>, vector<20x128xf32>, vector<8x128xf32> -> vector<8x128xf32>
    %4 = vector.broadcast %0 : vector<1x128xf32> to vector<8x128xf32>
    %5 = arith.addf %4, %3 : vector<8x128xf32>
    %cst_5 = arith.constant 0.000000e+00 : f32
    %6 = vector.broadcast %cst_5 : f32 to vector<8x128xf32>
    %7 = arith.maximumf %5, %6 : vector<8x128xf32>
    %c0_6 = arith.constant 0 : index
    %c0_7 = arith.constant 0 : index
    %8 = vector.load %arg5[%c0_6, %c0_7] : memref<1x2xf32, #tpu.memory_space<vmem>>, vector<1x2xf32>
    %c0_8 = arith.constant 0 : index
    %c0_9 = arith.constant 0 : index
    %9 = vector.load %arg4[%c0_8, %c0_9] : memref<128x2xf32, #tpu.memory_space<vmem>>, vector<128x2xf32>
    %cst_10 = arith.constant dense<0.000000e+00> : vector<8x2xf32>
    %10 = tpu.matmul %7, %9, %cst_10 {dimension_numbers = #tpu.dot_dimension_numbers<[1], [0], [0], [1], [0, 0, 1, 1], [], []>} : vector<8x128xf32>, vector<128x2xf32>, vector<8x2xf32> -> vector<8x2xf32>
    %11 = vector.broadcast %8 : vector<1x2xf32> to vector<8x2xf32>
    %12 = arith.addf %11, %10 : vector<8x2xf32>
    %c0_11 = arith.constant 0 : index
    %c0_12 = arith.constant 0 : index
    %13 = vector.load %arg6[%c0_11, %c0_12] : memref<8x2xf32, #tpu.memory_space<vmem>>, vector<8x2xf32>
    tpu.vector_store %arg6[%c0_11, %c0_12], %12 {strides = array<i32>} : memref<8x2xf32, #tpu.memory_space<vmem>>, vector<8x2xf32>,
    return
  }
  func.func @transform_0(%arg0: i32) -> (i32, i32) {
    %c0_i32 = arith.constant 0 : i32
    %c0_i32_0 = arith.constant 0 : i32
    return %arg0, %c0_i32 : i32, i32
  }
  func.func @transform_1(%arg0: i32) -> (i32, i32) {
    %c0_i32 = arith.constant 0 : i32
    %c0_i32_0 = arith.constant 0 : i32
    %c0_i32_1 = arith.constant 0 : i32
    return %c0_i32, %c0_i32_0 : i32, i32
  }
  func.func @transform_2(%arg0: i32) -> (i32, i32) {
    %c0_i32 = arith.constant 0 : i32
    %c0_i32_0 = arith.constant 0 : i32
    %c0_i32_1 = arith.constant 0 : i32
    return %c0_i32, %c0_i32_0 : i32, i32
  }
  func.func @transform_3(%arg0: i32) -> (i32, i32) {
    %c0_i32 = arith.constant 0 : i32
    %c0_i32_0 = arith.constant 0 : i32
    %c0_i32_1 = arith.constant 0 : i32
    return %c0_i32, %c0_i32_0 : i32, i32
  }
  func.func @transform_4(%arg0: i32) -> (i32, i32) {
    %c0_i32 = arith.constant 0 : i32
    %c0_i32_0 = arith.constant 0 : i32
    %c0_i32_1 = arith.constant 0 : i32
    return %c0_i32, %c0_i32_0 : i32, i32
  }
  func.func @transform_5(%arg0: i32) -> (i32, i32) {
    %c0_i32 = arith.constant 0 : i32
    %c0_i32_0 = arith.constant 0 : i32
    return %arg0, %c0_i32 : i32, i32
  }
}

</mosaic_0001>

<llo_original>
// kernel: tpu_custom_call.1
$region0: #{tpu_custom_call.1}
  #allocation0 [shape = 'u32[]', space=smem, size = 0x4, offset = 0x4, fixed_abs, tag = 'smem constant byte address 0x4 - core index']
  #allocation1 [shape = 'u32[72,128]{1,0:T(1,128)}', space=vmem, size = 0x9000, scoped, tag = 'internal scratch']
  %s0 = inlined_call_operand.vmem [shape: f32[8,20], index: 0, kind: input, shape index: {}]
  %s1 = inlined_call_operand.vmem [shape: f32[20,128], index: 1, kind: input, shape index: {}]
  %s2 = inlined_call_operand.vmem [shape: f32[1,128], index: 2, kind: input, shape index: {}]
  %s3 = inlined_call_operand.vmem [shape: f32[128,2], index: 3, kind: input, shape index: {}]
  %s4 = inlined_call_operand.vmem [shape: f32[1,2], index: 4, kind: input, shape index: {}]
  %s5 = inlined_call_operand.vmem [shape: f32[8,2], index: 5, kind: output, shape index: {}]
  %s6 = sld [smem:[#allocation0]]
  $region30: #{tpu_custom_call.1} parent=0
    _
  %s8 = ssub.s32 1, %s6
  %s9 = scalar_select 0, %s8, %s6
  // Predicated region
  $region2: #{tpu_custom_call.1} parent=0 // pred_check
    _
  $region3: #{tpu_custom_call.1} parent=0 // pred_check_branch
    %11 = sbr.rel (0) target = $region5
  $region4: #{tpu_custom_call.1} parent=0 // pred_region
    _
  $region5: #{tpu_custom_call.1} parent=0 // pred_fallthru
    _
  // Predicated region
  $region6: #{tpu_custom_call.1} parent=0 // pred_check
    _
  $region7: #{tpu_custom_call.1} parent=0 // pred_check_branch
    %13 = sbr.rel (0) target = $region9
  $region8: #{tpu_custom_call.1} parent=0 // pred_region
    _
  $region9: #{tpu_custom_call.1} parent=0 // pred_fallthru
    _
  // Predicated region
  $region10: #{tpu_custom_call.1} parent=0 // pred_check
    _
  $region11: #{tpu_custom_call.1} parent=0 // pred_check_branch
    %15 = sbr.rel (0) target = $region13
  $region12: #{tpu_custom_call.1} parent=0 // pred_region
    _
  $region13: #{tpu_custom_call.1} parent=0 // pred_fallthru
    _
  // Predicated region
  $region14: #{tpu_custom_call.1} parent=0 // pred_check
    _
  $region15: #{tpu_custom_call.1} parent=0 // pred_check_branch
    %17 = sbr.rel (0) target = $region17
  $region16: #{tpu_custom_call.1} parent=0 // pred_region
    _
  $region17: #{tpu_custom_call.1} parent=0 // pred_fallthru
    _
  // Predicated region
  $region18: #{tpu_custom_call.1} parent=0 // pred_check
    _
  $region19: #{tpu_custom_call.1} parent=0 // pred_check_branch
    %19 = sbr.rel (0) target = $region21
  $region20: #{tpu_custom_call.1} parent=0 // pred_region
    _
  $region21: #{tpu_custom_call.1} parent=0 // pred_fallthru
    _
  %v20 = vld [vmem:[%s2] sm:$0x1]
  %v21 = vld [vmem:[%s0] sm:$0xff]
  %v22 = vld [vmem:[%s1] sm:$0xff]
  %v23 = vld [vmem:[%s1 + $0x8] sm:$0xff]
  %v24 = vld [vmem:[%s1 + $0x10] sm:$0xf]
  %vm25 = vcmask 162816
  %v27 = vsel %vm25, %v21, 0
  %vm29 = vcmask 1043456
  %v31 = vsel %vm29, %v24, 0
  %33 = vmatpush.msra.mxu0 0.0
  %34 = vmatpush.msra.mxu0 0.0
  %35 = vmatpush.msra.mxu0 0.0
  %36 = vmatpush.msra.mxu0 0.0
  %37 = vmatpush.msra.mxu0 0.0
  %38 = vmatpush.msra.mxu0 0.0
  %39 = vmatpush.msra.mxu0 0.0
  %40 = vmatpush.msra.mxu0 0.0
  %41 = vmatpush.msra.mxu0 0.0
  %42 = vmatpush.msra.mxu0 0.0
  %43 = vmatpush.msra.mxu0 0.0
  %44 = vmatpush.msra.mxu0 0.0
  %45 = vmatpush.msra.mxu0 0.0
  %46 = vmatpush.msra.mxu0 %v31
  %47 = vmatpush.msra.mxu0 %v23
  %48 = vmatpush.msra.mxu0 %v22
  %49 = vmatmul.f32.gmra.mxu0 %v27
  %v50 = vpop.f32.mrf.mxu0
  %v51 = vadd.f32 0.0, %v50
  %52 = vdwg.mxu0
  %v54 = vperm.slane %v20, 0
  %v56 = vadd.f32 %v54, %v51
  %v57 = vmax.f32 %v56, 0.0
  %v58 = vld [vmem:[%s4] sm:$0x1]
  %v59 = vld [vmem:[%s3] sm:$0xff]
  %v60 = vld [vmem:[%s3 + $0x8] sm:$0xff]
  %v61 = vld [vmem:[%s3 + $0x10] sm:$0xff]
  %v62 = vld [vmem:[%s3 + $0x18] sm:$0xff]
  %v63 = vld [vmem:[%s3 + $0x20] sm:$0xff]
  %v64 = vld [vmem:[%s3 + $0x28] sm:$0xff]
  %v65 = vld [vmem:[%s3 + $0x30] sm:$0xff]
  %v66 = vld [vmem:[%s3 + $0x38] sm:$0xff]
  %v67 = vld [vmem:[%s3 + $0x40] sm:$0xff]
  %v68 = vld [vmem:[%s3 + $0x48] sm:$0xff]
  %v69 = vld [vmem:[%s3 + $0x50] sm:$0xff]
  %v70 = vld [vmem:[%s3 + $0x58] sm:$0xff]
  %v71 = vld [vmem:[%s3 + $0x60] sm:$0xff]
  %v72 = vld [vmem:[%s3 + $0x68] sm:$0xff]
  %v73 = vld [vmem:[%s3 + $0x70] sm:$0xff]
  %v74 = vld [vmem:[%s3 + $0x78] sm:$0xff]
  %75 = vmatpush.msra.mxu0 %v74
  %76 = vmatpush.msra.mxu0 %v73
  %77 = vmatpush.msra.mxu0 %v72
  %78 = vmatpush.msra.mxu0 %v71
  %79 = vmatpush.msra.mxu0 %v70
  %80 = vmatpush.msra.mxu0 %v69
  %81 = vmatpush.msra.mxu0 %v68
  %82 = vmatpush.msra.mxu0 %v67
  %83 = vmatpush.msra.mxu0 %v66
  %84 = vmatpush.msra.mxu0 %v65
  %85 = vmatpush.msra.mxu0 %v64
  %86 = vmatpush.msra.mxu0 %v63
  %87 = vmatpush.msra.mxu0 %v62
  %88 = vmatpush.msra.mxu0 %v61
  %89 = vmatpush.msra.mxu0 %v60
  %90 = vmatpush.msra.mxu0 %v59
  %91 = vmatmul.f32.gmra.mxu0 %v57
  %v92 = vpop.f32.mrf.mxu0
  %v93 = vadd.f32 0.0, %v92
  %94 = vdwg.mxu0
  %v96 = vperm.slane %v58, 0
  %v98 = vadd.f32 %v96, %v93
  %vm99 = vcmask 15360
  %100 = vst.msk [vmem:[%s5] sm:$0xff] %vm99, %v98
  // Predicated region
  $region22: #{tpu_custom_call.1} parent=0 // pred_check
    _
  $region23: #{tpu_custom_call.1} parent=0 // pred_check_branch
    %102 = sbr.rel (0) target = $region25
  $region24: #{tpu_custom_call.1} parent=0 // pred_region
    _
  $region25: #{tpu_custom_call.1} parent=0 // pred_fallthru
    _
  // Predicated region
  $region26: #{tpu_custom_call.1} parent=0 // pred_check
    _
  $region27: #{tpu_custom_call.1} parent=0 // pred_check_branch
    %104 = sbr.rel (0) target = $region29
  $region28: #{tpu_custom_call.1} parent=0 // pred_region
    _
  $region29: #{tpu_custom_call.1} parent=0 // pred_fallthru
    _

</llo_original>
